<compile_context>
chip_gen: v7x
topology: tpu7x:2x2x1
jax: 0.10.0
libtpu: 0.0.40
codegen_flags: <defaults>
</compile_context>

<pallas_src>
import numpy as np
import jax
import jax.numpy as jnp
from jax import lax
from jax.experimental import pallas as pl
from jax.experimental.pallas import tpu as pltpu


def _round_up(x: int, m: int) -> int:
    return ((x + m - 1) // m) * m


OUT_LANES = 128   # lane-dense output width (>= 2*P*d) -> unmasked vst


def _kernel(y_ref, cmp_ref, tab_ref, out_ref):
    y = y_ref[...]            # (tb, P)   raw parameter values
    cmp_vals = cmp_ref[...]   # (P, PV)   NaN outside parameter p's own column segment
    P = y.shape[1]
    # Block one-hot (tb, PV): column p*Vmax+v is 1 iff y[:, p] == vocab_p[v].
    # Segments are disjoint (NaN never matches), so the P VPU compares just sum.
    onehot = (y[:, 0:1] == cmp_vals[0:1, :]).astype(jnp.float32)
    for p in range(1, P):
        onehot = onehot + (y[:, p:p + 1] == cmp_vals[p:p + 1, :]).astype(jnp.float32)
    # Single MXU matmul against the block-structured fused table emits the final
    # interleaved [param_emb_0 | val_emb_0 | param_emb_1 | ...] layout directly.
    # HIGHEST precision: the matmul is an exact row-select, keep f32 passthrough exact.
    out_ref[...] = jnp.dot(onehot, tab_ref[...],
                           preferred_element_type=jnp.float32,
                           precision=lax.Precision.HIGHEST)


def multi_embeddings_forward(y, cmp_vals, table, out_dim, *, tb=None):
    """y:(B,P) f32, cmp_vals:(P,PV) f32, table:(PV, 128) f32 -> (B, out_dim) f32."""
    B, P = y.shape
    PV = cmp_vals.shape[1]
    out_pad = table.shape[1]          # 128: lane-dense output columns
    if tb is None:
        # Large tiles amortize per-step overhead; keep >=4 grid steps when B allows so
        # v7x can shard batch tiles across both TensorCores.
        tb = max(8, min(4096, _round_up(pl.cdiv(B, 4), 8)))
    else:
        tb = max(8, (tb // 8) * 8)
    grid = (pl.cdiv(B, tb),)          # partial boundary block: OOB stores are dropped
    out = pl.pallas_call(
        _kernel,
        out_shape=jax.ShapeDtypeStruct((B, out_pad), jnp.float32),
        grid_spec=pltpu.PrefetchScalarGridSpec(
            num_scalar_prefetch=0,
            grid=grid,
            in_specs=[
                pl.BlockSpec((tb, P), lambda i: (i, 0)),        # streamed batch tile
                pl.BlockSpec((P, PV), lambda i: (0, 0)),        # resident across steps
                pl.BlockSpec((PV, out_pad), lambda i: (0, 0)),  # resident across steps
            ],
            out_specs=pl.BlockSpec((tb, out_pad), lambda i: (i, 0)),
        ),
        compiler_params=pltpu.CompilerParams(
            dimension_semantics=("parallel",),       # v7x: shard tiles across 2 TCs
            vmem_limit_bytes=32 * 1024 * 1024,       # covers v5e's 16 MiB scoped default
        ),
    )(y, cmp_vals, table)
    return out[:, :out_dim]


def build_fused_tables(parameter_space, ptab, vtab):
    """Host-side precompute of the comparison table and block-structured fused table."""
    ptab = np.asarray(ptab, dtype=np.float32)          # (P, d)
    vtab = np.asarray(vtab, dtype=np.float32)          # (P, Vmax, d)
    P, d = ptab.shape
    Vmax = vtab.shape[1]
    out_dim = 2 * P * d
    out_pad = _round_up(out_dim, OUT_LANES)            # lane-dense output columns
    PV = _round_up(P * Vmax, 32)                       # aligned one-hot / MXU K dim
    cmp_np = np.full((P, PV), np.nan, dtype=np.float32)   # NaN: never matches
    T_np = np.zeros((PV, out_pad), dtype=np.float32)
    for p, vocab in enumerate(parameter_space.values()):
        Vp = len(vocab)
        base = p * Vmax
        cmp_np[p, base: base + Vp] = np.asarray(vocab, dtype=np.float32)
        T_np[base: base + Vmax, 2 * p * d:(2 * p + 1) * d] = ptab[p]      # param-type emb
        T_np[base: base + Vmax, (2 * p + 1) * d:(2 * p + 2) * d] = vtab[p]  # value embs
    return jnp.asarray(cmp_np), jnp.asarray(T_np), out_dim


def _reference(y_np, vals_np, ptab_np, vtab_np, vocab_sizes):
    """Pure-numpy reference mirroring the PyTorch forward."""
    B, P = y_np.shape
    d = ptab_np.shape[1]
    outs = []
    for p in range(P):
        vocab = vals_np[p, :vocab_sizes[p]]
        cat = np.array([int(np.where(y_np[b, p] == vocab)[0][0]) for b in range(B)])
        outs.append(np.broadcast_to(ptab_np[p][None, :], (B, d)))
        outs.append(vtab_np[p][cat])
    return np.concatenate(outs, axis=1)


if __name__ == "__main__":
    # ---- synthetic parameter space (3 parameters, differing vocab sizes) ----
    parameter_space = {
        "temperature": [300.0, 350.0, 400.0, 450.0, 500.0, 550.0, 600.0],   # 7
        "pressure":    [1.0, 2.0, 5.0, 10.0, 20.0],                          # 5
        "composition": [0.0, 0.1, 0.2, 0.3, 0.4, 0.5, 0.6, 0.7, 0.8],        # 9
    }
    embedding_dim = 48
    P = len(parameter_space)
    d = embedding_dim // P // 2            # = 8 per-key embedding dim
    vocab_sizes = [len(v) for v in parameter_space.values()]
    Vmax = max(vocab_sizes)

    # padded vocab-value table (P, Vmax) used only to synthesize y / in the reference
    SENTINEL = np.float32(-1e30)
    vals_np = np.full((P, Vmax), SENTINEL, dtype=np.float32)
    for p, v in enumerate(parameter_space.values()):
        vals_np[p, :len(v)] = np.asarray(v, dtype=np.float32)

    # ---- deterministic parameter init (nn.Embedding default ~ N(0,1)) ----
    key = jax.random.PRNGKey(0)
    k_ptab, k_vtab, k_idx = jax.random.split(key, 3)
    ptab = jax.random.normal(k_ptab, (P, d), dtype=jnp.float32)        # param_type_emb.weight
    vtab = jax.random.normal(k_vtab, (P, Vmax, d), dtype=jnp.float32)  # embedding_layers[*].weight

    cmp_vals, table, out_dim = build_fused_tables(parameter_space, ptab, vtab)

    # ---- small batch of valid parameter values: y (B, P) ----
    B = 20
    idx = jax.random.randint(k_idx, (B, P), minval=0,
                             maxval=jnp.asarray(vocab_sizes))          # per-column vocab bounds
    idx_np = np.asarray(idx)
    y_np = np.stack([vals_np[p, idx_np[:, p]] for p in range(P)], axis=1).astype(np.float32)
    y = jnp.asarray(y_np)

    # ---- run kernel (default tb -> 8 at this toy B: 3 grid steps incl. partial boundary) ----
    out = multi_embeddings_forward(y, cmp_vals, table, out_dim)
    out = jax.block_until_ready(out)

    # ---- verify against reference ----
    ref = _reference(y_np, vals_np, np.asarray(ptab), np.asarray(vtab), vocab_sizes)
    np.testing.assert_allclose(np.asarray(out), ref, rtol=1e-5, atol=1e-5)
    assert out.shape == (B, P * 2 * d)

    print("KERNEL_OK")
</pallas_src>

<mosaic_0001>
module attributes {stable_mosaic.version = 11 : i64} {
  func.func @_kernel(%arg0: i32, %arg1: memref<8x3xf32, #tpu.memory_space<vmem>>, %arg2: memref<3x32xf32, #tpu.memory_space<vmem>>, %arg3: memref<32x128xf32, #tpu.memory_space<vmem>>, %arg4: memref<8x128xf32, #tpu.memory_space<vmem>>) attributes {dimension_semantics = [#tpu.dimension_semantics<parallel>], iteration_bounds = array<i64: 3>, scalar_prefetch = 0 : i64, scratch_operands = 0 : i64, tpu.core_type = #tpu.core_type<tc>, window_params = [{transform_indices = @transform_0, window_bounds = array<i64: 8, 3>}, {pipeline_mode = #tpu.pipeline_mode<synchronous>, transform_indices = @transform_1, window_bounds = array<i64: 3, 32>}, {pipeline_mode = #tpu.pipeline_mode<synchronous>, transform_indices = @transform_2, window_bounds = array<i64: 32, 128>}, {transform_indices = @transform_3, window_bounds = array<i64: 8, 128>}]} {
    %c0 = arith.constant 0 : index
    %c0_0 = arith.constant 0 : index
    %0 = vector.load %arg1[%c0, %c0_0] : memref<8x3xf32, #tpu.memory_space<vmem>>, vector<8x3xf32>
    %c0_1 = arith.constant 0 : index
    %c0_2 = arith.constant 0 : index
    %1 = vector.load %arg2[%c0_1, %c0_2] : memref<3x32xf32, #tpu.memory_space<vmem>>, vector<3x32xf32>
    %2 = vector.extract_strided_slice %0 {offsets = [0, 0], sizes = [8, 1], strides = [1, 1]} : vector<8x3xf32> to vector<8x1xf32>
    %3 = vector.extract_strided_slice %1 {offsets = [0, 0], sizes = [1, 32], strides = [1, 1]} : vector<3x32xf32> to vector<1x32xf32>
    %4 = vector.broadcast %2 : vector<8x1xf32> to vector<8x32xf32>
    %5 = vector.broadcast %3 : vector<1x32xf32> to vector<8x32xf32>
    %6 = arith.cmpf oeq, %4, %5 : vector<8x32xf32>
    %7 = arith.extui %6 : vector<8x32xi1> to vector<8x32xi32>
    %8 = arith.sitofp %7 : vector<8x32xi32> to vector<8x32xf32>
    %9 = vector.extract_strided_slice %0 {offsets = [0, 1], sizes = [8, 1], strides = [1, 1]} : vector<8x3xf32> to vector<8x1xf32>
    %10 = vector.extract_strided_slice %1 {offsets = [1, 0], sizes = [1, 32], strides = [1, 1]} : vector<3x32xf32> to vector<1x32xf32>
    %11 = vector.broadcast %9 : vector<8x1xf32> to vector<8x32xf32>
    %12 = vector.broadcast %10 : vector<1x32xf32> to vector<8x32xf32>
    %13 = arith.cmpf oeq, %11, %12 : vector<8x32xf32>
    %14 = arith.extui %13 : vector<8x32xi1> to vector<8x32xi32>
    %15 = arith.sitofp %14 : vector<8x32xi32> to vector<8x32xf32>
    %16 = arith.addf %8, %15 : vector<8x32xf32>
    %17 = vector.extract_strided_slice %0 {offsets = [0, 2], sizes = [8, 1], strides = [1, 1]} : vector<8x3xf32> to vector<8x1xf32>
    %18 = vector.extract_strided_slice %1 {offsets = [2, 0], sizes = [1, 32], strides = [1, 1]} : vector<3x32xf32> to vector<1x32xf32>
    %19 = vector.broadcast %17 : vector<8x1xf32> to vector<8x32xf32>
    %20 = vector.broadcast %18 : vector<1x32xf32> to vector<8x32xf32>
    %21 = arith.cmpf oeq, %19, %20 : vector<8x32xf32>
    %22 = arith.extui %21 : vector<8x32xi1> to vector<8x32xi32>
    %23 = arith.sitofp %22 : vector<8x32xi32> to vector<8x32xf32>
    %24 = arith.addf %16, %23 : vector<8x32xf32>
    %c0_3 = arith.constant 0 : index
    %c0_4 = arith.constant 0 : index
    %25 = vector.load %arg3[%c0_3, %c0_4] : memref<32x128xf32, #tpu.memory_space<vmem>>, vector<32x128xf32>
    %cst = arith.constant dense<0.000000e+00> : vector<8x128xf32>
    %26 = tpu.matmul %24, %25, %cst {dimension_numbers = #tpu.dot_dimension_numbers<[1], [0], [0], [1], [0, 0, 1, 1], [], []>, precision = #tpu.contract_precision<fp32>} : vector<8x32xf32>, vector<32x128xf32>, vector<8x128xf32> -> vector<8x128xf32>
    %c0_5 = arith.constant 0 : index
    %c0_6 = arith.constant 0 : index
    %27 = vector.load %arg4[%c0_5, %c0_6] : memref<8x128xf32, #tpu.memory_space<vmem>>, vector<8x128xf32>
    tpu.vector_store %arg4[%c0_5, %c0_6], %26 {strides = array<i32>} : memref<8x128xf32, #tpu.memory_space<vmem>>, vector<8x128xf32>,
    return
  }
  func.func @transform_0(%arg0: i32) -> (i32, i32) {
    %c0_i32 = arith.constant 0 : i32
    %c0_i32_0 = arith.constant 0 : i32
    return %arg0, %c0_i32 : i32, i32
  }
  func.func @transform_1(%arg0: i32) -> (i32, i32) {
    %c0_i32 = arith.constant 0 : i32
    %c0_i32_0 = arith.constant 0 : i32
    %c0_i32_1 = arith.constant 0 : i32
    return %c0_i32, %c0_i32_0 : i32, i32
  }
  func.func @transform_2(%arg0: i32) -> (i32, i32) {
    %c0_i32 = arith.constant 0 : i32
    %c0_i32_0 = arith.constant 0 : i32
    %c0_i32_1 = arith.constant 0 : i32
    return %c0_i32, %c0_i32_0 : i32, i32
  }
  func.func @transform_3(%arg0: i32) -> (i32, i32) {
    %c0_i32 = arith.constant 0 : i32
    %c0_i32_0 = arith.constant 0 : i32
    return %arg0, %c0_i32 : i32, i32
  }
}

</mosaic_0001>

<llo_original>
// kernel: tpu_custom_call.1
$region0: #{tpu_custom_call.1}
  #allocation0 [shape = 'u32[]', space=smem, size = 0x4, offset = 0x4, fixed_abs, tag = 'smem constant byte address 0x4 - core index']
  #allocation1 [shape = 'u32[144,128]{1,0:T(1,128)}', space=vmem, size = 0x12000, scoped, tag = 'internal scratch']
  %s0 = inlined_call_operand.vmem [shape: f32[20,3], index: 0, kind: input, shape index: {}]
  %s1 = inlined_call_operand.hbm [shape: f32[3,32], index: 1, kind: input, shape index: {}]
  %s2 = inlined_call_operand.vmem [shape: f32[32,128], index: 2, kind: input, shape index: {}]
  %s3 = inlined_call_operand.hbm [shape: f32[20,128], index: 3, kind: output, shape index: {}]
  %s4 = sld [smem:[#allocation0]]
  $region49: #{tpu_custom_call.1} parent=0
    _
  %s6 = ssub.s32 1, %s4
  %s7 = scalar_select 0, %s6, %s4
  $region1: #{tpu_custom_call.1} parent=0
    #allocation2 [shape = 'u8[2048]{0}', space=vmem, size = 0x800, scoped, tag = 'input window, operand 1, single buffered']
    #allocation3 [shape = 's32[2]{0}', space=sflag, size = 0x8, scoped, tag = 'scoped memory for tpu_custom_call.1']
    #allocation4 [shape = 's32[2]{0}', space=sflag, size = 0x8, scoped, tag = 'scoped memory for tpu_custom_call.1']
    #allocation5 [shape = 'u8[8192]{0}', space=vmem, size = 0x2000, scoped, tag = 'output window, operand 0']
    %8 = vsyncpa [#allocation3], 0
    %9 = vsyncpa [#allocation4], 0
    %s10 = scalar_lea.sflag [#allocation4], 1
    %11 = vsyncpa %s10, 0
    loop: start=0, step=1, limit=5
    $region2: #{tpu_custom_call.1} parent=1 // loop_pre_header
      _
    $region3: #{tpu_custom_call.1} parent=1 // loop_header
      %s13 = sphi 0, %s17
      %p14 = scmp.ge.s32.totalorder %s13, 5
      %s23 = sphi 0, %s25
      %s26 = sphi 0, %s23
      %s27 = sphi 0, %s26
      %s43 = sphi 0, %s27
      %s47 = sphi 0, %s47
      %s49 = sphi 0, %s47
      %s50 = sphi 0, %s49
      %s64 = sphi 0, %s50
      %s68 = sphi 0, %s68
      %s70 = sphi 0, %s68
      %s71 = sphi 0, %s70
      %s85 = sphi 0, %s71
      %s91 = sphi 0, %s93
      %s94 = sphi 0, %s91
      %s95 = sphi 0, %s94
      %s111 = sphi 0, %s95
    $region4: #{tpu_custom_call.1} parent=1 // loop_header_branch
      %16 = sbr.rel (%p14) target = $region8
    $region5: #{tpu_custom_call.1} parent=1 // loop_body
      %s18 = ssub.s32 %s13, 1
      %s19 = ssub.s32 %s13, 2
      %s20 = sadd.s32 %s13, 1
      %s21 = ssub.s32 %s13, %s20
      %p22 = scmp.eq.s32.totalorder %s21, 0
      %s24 = sadd.s32 %s23, 1
      %s25 = scalar_select %p22, %s23, %s24
      %p28 = pneg %p22
      %p29 = scmp.eq.s32.totalorder %s13, 2
      %p30 = por %p28, %p29
      %p31 = scmp.ne.s32.totalorder %s23, %s26
      %p32 = scmp.eq.s32.totalorder %s13, 0
      %p33 = por %p31, %p32
      %p34 = scmp.ne.s32.totalorder %s23, %s26
      %p35 = scmp.eq.s32.totalorder %s18, 2
      %p36 = por %p34, %p35
      %p37 = scmp.ne.s32.totalorder %s26, %s27
      %p38 = scmp.eq.s32.totalorder %s18, 0
      %p39 = por %p37, %p38
      %p40 = scmp.ne.s32.totalorder %s26, %s27
      %p41 = scmp.eq.s32.totalorder %s19, 2
      %p42 = por %p40, %p41
      %p44 = scmp.ne.s32.totalorder %s27, %s43
      %p45 = scmp.eq.s32.totalorder %s19, 0
      %p46 = por %p44, %p45
      %s48 = sadd.s32 %s47, 1
      %p51 = scmp.eq.s32.totalorder %s13, 2
      %p52 = scmp.ne.s32.totalorder %s47, %s49
      %p53 = scmp.eq.s32.totalorder %s13, 0
      %p54 = por %p52, %p53
      %p55 = scmp.ne.s32.totalorder %s47, %s49
      %p56 = scmp.eq.s32.totalorder %s18, 2
      %p57 = por %p55, %p56
      %p58 = scmp.ne.s32.totalorder %s49, %s50
      %p59 = scmp.eq.s32.totalorder %s18, 0
      %p60 = por %p58, %p59
      %p61 = scmp.ne.s32.totalorder %s49, %s50
      %p62 = scmp.eq.s32.totalorder %s19, 2
      %p63 = por %p61, %p62
      %p65 = scmp.ne.s32.totalorder %s50, %s64
      %p66 = scmp.eq.s32.totalorder %s19, 0
      %p67 = por %p65, %p66
      %s69 = sadd.s32 %s68, 1
      %p72 = scmp.eq.s32.totalorder %s13, 2
      %p73 = scmp.ne.s32.totalorder %s68, %s70
      %p74 = scmp.eq.s32.totalorder %s13, 0
      %p75 = por %p73, %p74
      %p76 = scmp.ne.s32.totalorder %s68, %s70
      %p77 = scmp.eq.s32.totalorder %s18, 2
      %p78 = por %p76, %p77
      %p79 = scmp.ne.s32.totalorder %s70, %s71
      %p80 = scmp.eq.s32.totalorder %s18, 0
      %p81 = por %p79, %p80
      %p82 = scmp.ne.s32.totalorder %s70, %s71
      %p83 = scmp.eq.s32.totalorder %s19, 2
      %p84 = por %p82, %p83
      %p86 = scmp.ne.s32.totalorder %s71, %s85
      %p87 = scmp.eq.s32.totalorder %s19, 0
      %p88 = por %p86, %p87
      %s89 = ssub.s32 %s13, %s20
      %p90 = scmp.eq.s32.totalorder %s89, 0
      %s92 = sadd.s32 %s91, 1
      %s93 = scalar_select %p90, %s91, %s92
      %p96 = pneg %p90
      %p97 = scmp.eq.s32.totalorder %s13, 2
      %p98 = por %p96, %p97
      %p99 = scmp.ne.s32.totalorder %s91, %s94
      %p100 = scmp.eq.s32.totalorder %s13, 0
      %p101 = por %p99, %p100
      %p102 = scmp.ne.s32.totalorder %s91, %s94
      %p103 = scmp.eq.s32.totalorder %s18, 2
      %p104 = por %p102, %p103
      %p105 = scmp.ne.s32.totalorder %s94, %s95
      %p106 = scmp.eq.s32.totalorder %s18, 0
      %p107 = por %p105, %p106
      %p108 = scmp.ne.s32.totalorder %s94, %s95
      %p109 = scmp.eq.s32.totalorder %s19, 2
      %p110 = por %p108, %p109
      %p112 = scmp.ne.s32.totalorder %s95, %s111
      %p113 = scmp.eq.s32.totalorder %s19, 0
      %p114 = por %p112, %p113
      %p115 = scmp.le.s32.totalorder 1, %s13
      %p116 = scmp.lt.s32.totalorder %s13, 4
      %p117 = pnand %p115, %p116
      %p118 = pneg %p117
      // Predicated region
      $region9: #{tpu_custom_call.1} parent=5 // pred_check
        _
      $region10: #{tpu_custom_call.1} parent=5 // pred_check_branch
        %120 = sbr.rel (%p117) target = $region12
      $region11: #{tpu_custom_call.1} parent=5 // pred_region
        %s121 = ssub.s32 %s13, 1
        // Predicated region
        $region13: #{tpu_custom_call.1} parent=11 // pred_check
          %p122 = pneg %p60
        $region14: #{tpu_custom_call.1} parent=11 // pred_check_branch
          %124 = sbr.rel (%p122) target = $region16
        $region15: #{tpu_custom_call.1} parent=11 // pred_region
          %s126 = ssub.s32 64, 64
          %127 = vsyncadd [#allocation3], %s126
          %s129 = sshll.u32 [#allocation2], 4
          %s130 = int_to_ptr.vmem [resolvable:$true] %s129
          %132 = dma.hbm_to_vmem [thread:$0]  %s1, 64, %s130, [#allocation3]
        $region16: #{tpu_custom_call.1} parent=11 // pred_fallthru
          _
        // Predicated region
        $region17: #{tpu_custom_call.1} parent=11 // pred_check
          %p133 = pneg %p81
        $region18: #{tpu_custom_call.1} parent=11 // pred_check_branch
          %135 = sbr.rel (%p133) target = $region20
        $region19: #{tpu_custom_call.1} parent=11 // pred_region
          _
        $region20: #{tpu_custom_call.1} parent=11 // pred_fallthru
          _
      $region12: #{tpu_custom_call.1} parent=5 // pred_fallthru
        _
      %p136 = scmp.lt.s32.totalorder %s13, 3
      // Predicated region
      $region21: #{tpu_custom_call.1} parent=5 // pred_check
        %p137 = pneg %p136
      $region22: #{tpu_custom_call.1} parent=5 // pred_check_branch
        %139 = sbr.rel (%p137) target = $region24
      $region23: #{tpu_custom_call.1} parent=5 // pred_region
        // Predicated region
        $region25: #{tpu_custom_call.1} parent=23 // pred_check
          %p140 = pneg %p33
        $region26: #{tpu_custom_call.1} parent=23 // pred_check_branch
          %142 = sbr.rel (%p140) target = $region28
        $region27: #{tpu_custom_call.1} parent=23 // pred_region
          %p143 = scmp.lt.s32.totalorder %s13, 2
          %s144 = scalar_select %p143, %s13, 2
          %s145 = smul.addr %s144, 8
          %s146 = scalar_lea.vmem %s0, %s145
        $region28: #{tpu_custom_call.1} parent=23 // pred_fallthru
          _
      $region24: #{tpu_custom_call.1} parent=5 // pred_fallthru
        _
      %p147 = scmp.le.s32.totalorder 1, %s13
      %p148 = scmp.lt.s32.totalorder %s13, 4
      %p149 = pnand %p147, %p148
      %p150 = pneg %p149
      // Predicated region
      $region29: #{tpu_custom_call.1} parent=5 // pred_check
        _
      $region30: #{tpu_custom_call.1} parent=5 // pred_check_branch
        %152 = sbr.rel (%p149) target = $region32
      $region31: #{tpu_custom_call.1} parent=5 // pred_region
        %s153 = ssub.s32 %s13, 1
        // Predicated region
        $region33: #{tpu_custom_call.1} parent=31 // pred_check
          %p154 = pneg %p60
        $region34: #{tpu_custom_call.1} parent=31 // pred_check_branch
          %156 = sbr.rel (%p154) target = $region36
        $region35: #{tpu_custom_call.1} parent=31 // pred_region
          %157 = dma.done [#allocation3], 64
        $region36: #{tpu_custom_call.1} parent=31 // pred_fallthru
          _
        %p158 = scmp.lt.s32.totalorder %s18, 2
        %s159 = scalar_select %p158, %s18, 2
        %s160 = smul.addr %s159, 8
        %s161 = scalar_lea.vmem %s0, %s160
        %p162 = pneg %p39
        %p163 = pneg %p36
        %p164 = pneg %p60
        %p165 = pneg %p57
        %p166 = pneg %p81
        %p167 = pneg %p78
        %p168 = pneg %p107
        %p169 = pneg %p104
        %s170 = sand.u32 %s94, 1
        %s171 = scalar_lea.sflag [#allocation4], %s170
        %s172 = sand.u32 %s94, 1
        %s173 = smul.addr %s172, 8
        %s174 = scalar_lea.vmem [#allocation5], %s173
        %p175 = scmp.lt.s32.totalorder %s18, 2
        %s176 = scalar_select %p175, %s18, 2
        %s177 = smul.addr %s176, 8
        %s178 = scalar_lea.vmem %s0, %s177
        %v179 = vld [vmem:[%s178] sm:$0xff]
        %v180 = vld [vmem:[#allocation2] sm:$0x7]
        %182 = vset.pattern.permute.xlu0 0
        %183 = vperm.xlu0 %182, %v179
        %v184 = vpop.permute.xlu0 %183
        %v186 = vlaneseq
        %v187 = vshrl.u32 %v186, 7
        %v188 = vsub.s32 0, %v187
        %v189 = vrot.slane %v180, %v188
        %vm190 = vcmp.eq.f32.partialorder %v184, %v189
        %v191 = vsel %vm190, 1, 0
        %v192 = vcvt.s32.f32 %v191
        %193 = vset.pattern.permute.xlu0 1
        %194 = vperm.xlu0 %193, %v179
        %v195 = vpop.permute.xlu0 %194
        %v197 = vlaneseq
        %v198 = vshrl.u32 %v197, 7
        %v199 = vsub.s32 1, %v198
        %v200 = vrot.slane %v180, %v199
        %vm201 = vcmp.eq.f32.partialorder %v195, %v200
        %v202 = vsel %vm201, 1, 0
        %v203 = vcvt.s32.f32 %v202
        %v204 = vadd.f32 %v192, %v203
        %205 = vset.pattern.permute.xlu0 2
        %206 = vperm.xlu0 %205, %v179
        %v207 = vpop.permute.xlu0 %206
        %v209 = vlaneseq
        %v210 = vshrl.u32 %v209, 7
        %v211 = vsub.s32 2, %v210
        %v212 = vrot.slane %v180, %v211
        %vm213 = vcmp.eq.f32.partialorder %v207, %v212
        %v214 = vsel %vm213, 1, 0
        %v215 = vcvt.s32.f32 %v214
        %v216 = vadd.f32 %v204, %v215
        %v217 = vld [vmem:[%s2] sm:$0xff]
        %v218 = vld [vmem:[%s2 + $0x8] sm:$0xff]
        %v219 = vld [vmem:[%s2 + $0x10] sm:$0xff]
        %v220 = vld [vmem:[%s2 + $0x18] sm:$0xff]
        %vm221 = vcmask 261120
        %v223 = vsel %vm221, %v216, 0
        %225 = vmatprep.subr.mxu0 0.0
        %v226 = vand.u32 %v217, 4294901760
        %227 = vmatpush1.msra.mxu0 %v226
        %228 = vmatprep.subr.mxu0 0.0
        %v229 = vand.u32 %v218, 4294901760
        %230 = vmatpush1.msra.mxu0 %v229
        %231 = vmatprep.subr.mxu0 0.0
        %v232 = vand.u32 %v219, 4294901760
        %233 = vmatpush1.msra.mxu0 %v232
        %234 = vmatprep.subr.mxu0 0.0
        %v235 = vand.u32 %v220, 4294901760
        %236 = vmatpush1.msra.mxu0 %v235
        %237 = vmatprep.subr.mxu0 0.0
        %238 = vmatpush1.msra.mxu0 0.0
        %239 = vmatprep.subr.mxu0 0.0
        %240 = vmatpush1.msra.mxu0 0.0
        %241 = vmatprep.subr.mxu0 0.0
        %242 = vmatpush1.msra.mxu0 0.0
        %243 = vmatprep.subr.mxu0 0.0
        %244 = vmatpush1.msra.mxu0 0.0
        %245 = vmatprep.subr.mxu0 0.0
        %246 = vmatpush1.msra.mxu0 0.0
        %247 = vmatprep.subr.mxu0 0.0
        %248 = vmatpush1.msra.mxu0 0.0
        %249 = vmatprep.subr.mxu0 0.0
        %250 = vmatpush1.msra.mxu0 0.0
        %251 = vmatprep.subr.mxu0 0.0
        %252 = vmatpush1.msra.mxu0 0.0
        %253 = vmatprep.subr.mxu0 0.0
        %254 = vmatpush1.msra.mxu0 0.0
        %255 = vmatprep.subr.mxu0 0.0
        %256 = vmatpush1.msra.mxu0 0.0
        %257 = vmatprep.subr.mxu0 0.0
        %258 = vmatpush1.msra.mxu0 0.0
        %259 = vmatprep.subr.mxu0 0.0
        %260 = vmatpush1.msra.mxu0 0.0
        %261 = vmatprep.subr.mxu0 0.0
        %262 = vmatpush1.msra.mxu0 0.0
        %263 = vmatprep.subr.mxu0 0.0
        %264 = vmatpush1.msra.mxu0 0.0
        %265 = vmatprep.subr.mxu0 0.0
        %266 = vmatpush1.msra.mxu0 0.0
        %267 = vmatprep.subr.mxu0 0.0
        %268 = vmatpush1.msra.mxu0 0.0
        %269 = vmatprep.subr.mxu0 0.0
        %270 = vmatpush1.msra.mxu0 0.0
        %271 = vmatprep.subr.mxu0 0.0
        %272 = vmatpush1.msra.mxu0 0.0
        %273 = vmatprep.subr.mxu0 0.0
        %274 = vmatpush1.msra.mxu0 0.0
        %275 = vmatprep.subr.mxu0 0.0
        %276 = vmatpush1.msra.mxu0 0.0
        %277 = vmatprep.subr.mxu0 0.0
        %278 = vmatpush1.msra.mxu0 0.0
        %279 = vmatprep.subr.mxu0 0.0
        %280 = vmatpush1.msra.mxu0 0.0
        %281 = vmatprep.subr.mxu0 0.0
        %282 = vmatpush1.msra.mxu0 0.0
        %283 = vmatprep.subr.mxu0 0.0
        %284 = vmatpush1.msra.mxu0 0.0
        %285 = vmatprep.subr.mxu0 0.0
        %286 = vmatpush1.msra.mxu0 0.0
        %287 = vmatprep.subr.mxu0 0.0
        %288 = vmatpush1.msra.mxu0 0.0
        %289 = vmatprep.subr.mxu0 0.0
        %290 = vmatpush1.msra.mxu0 0.0
        %291 = vmatprep.subr.mxu0 0.0
        %292 = vmatpush1.msra.mxu0 0.0
        %293 = vmatprep.mubr.f32.mxu0 0.0
        %v294 = vand.u32 %v223, 4294901760
        %v295 = vsub.f32 %v223, %v294
        %v296 = vand.u32 %v295, 4294901760
        %v297 = vsub.f32 %v295, %v296
        %v298 = vand.u32 %v297, 4294901760
        %299 = vmatmul.mubr.f32.gmra.mrb[0].mxu0 %v298
        %v300 = vpop.f32.mrb[0].mxu0
        %v301 = vadd.f32 0.0, %v300
        %v302 = vpop.f32.mrb[0].mxu0
        %303 = vdwg.mxu0
        %304 = vmatprep.subr.mxu0 0.0
        %v305 = vand.u32 %v217, 4294901760
        %v306 = vsub.f32 %v217, %v305
        %v307 = vand.u32 %v306, 4294901760
        %v308 = vsub.f32 %v306, %v307
        %v309 = vand.u32 %v308, 4294901760
        %310 = vmatpush1.msra.mxu0 %v309
        %311 = vmatprep.subr.mxu0 0.0
        %v312 = vand.u32 %v218, 4294901760
        %v313 = vsub.f32 %v218, %v312
        %v314 = vand.u32 %v313, 4294901760
        %v315 = vsub.f32 %v313, %v314
        %v316 = vand.u32 %v315, 4294901760
        %317 = vmatpush1.msra.mxu0 %v316
        %318 = vmatprep.subr.mxu0 0.0
        %v319 = vand.u32 %v219, 4294901760
        %v320 = vsub.f32 %v219, %v319
        %v321 = vand.u32 %v320, 4294901760
        %v322 = vsub.f32 %v320, %v321
        %v323 = vand.u32 %v322, 4294901760
        %324 = vmatpush1.msra.mxu0 %v323
        %325 = vmatprep.subr.mxu0 0.0
        %v326 = vand.u32 %v220, 4294901760
        %v327 = vsub.f32 %v220, %v326
        %v328 = vand.u32 %v327, 4294901760
        %v329 = vsub.f32 %v327, %v328
        %v330 = vand.u32 %v329, 4294901760
        %331 = vmatpush1.msra.mxu0 %v330
        %332 = vmatprep.subr.mxu0 0.0
        %333 = vmatpush1.msra.mxu0 0.0
        %334 = vmatprep.subr.mxu0 0.0
        %335 = vmatpush1.msra.mxu0 0.0
        %336 = vmatprep.subr.mxu0 0.0
        %337 = vmatpush1.msra.mxu0 0.0
        %338 = vmatprep.subr.mxu0 0.0
        %339 = vmatpush1.msra.mxu0 0.0
        %340 = vmatprep.subr.mxu0 0.0
        %341 = vmatpush1.msra.mxu0 0.0
        %342 = vmatprep.subr.mxu0 0.0
        %343 = vmatpush1.msra.mxu0 0.0
        %344 = vmatprep.subr.mxu0 0.0
        %345 = vmatpush1.msra.mxu0 0.0
        %346 = vmatprep.subr.mxu0 0.0
        %347 = vmatpush1.msra.mxu0 0.0
        %348 = vmatprep.subr.mxu0 0.0
        %349 = vmatpush1.msra.mxu0 0.0
        %350 = vmatprep.subr.mxu0 0.0
        %351 = vmatpush1.msra.mxu0 0.0
        %352 = vmatprep.subr.mxu0 0.0
        %353 = vmatpush1.msra.mxu0 0.0
        %354 = vmatprep.subr.mxu0 0.0
        %355 = vmatpush1.msra.mxu0 0.0
        %356 = vmatprep.subr.mxu0 0.0
        %357 = vmatpush1.msra.mxu0 0.0
        %358 = vmatprep.subr.mxu0 0.0
        %359 = vmatpush1.msra.mxu0 0.0
        %360 = vmatprep.subr.mxu0 0.0
        %361 = vmatpush1.msra.mxu0 0.0
        %362 = vmatprep.subr.mxu0 0.0
        %363 = vmatpush1.msra.mxu0 0.0
        %364 = vmatprep.subr.mxu0 0.0
        %365 = vmatpush1.msra.mxu0 0.0
        %366 = vmatprep.subr.mxu0 0.0
        %367 = vmatpush1.msra.mxu0 0.0
        %368 = vmatprep.subr.mxu0 0.0
        %369 = vmatpush1.msra.mxu0 0.0
        %370 = vmatprep.subr.mxu0 0.0
        %371 = vmatpush1.msra.mxu0 0.0
        %372 = vmatprep.subr.mxu0 0.0
        %373 = vmatpush1.msra.mxu0 0.0
        %374 = vmatprep.subr.mxu0 0.0
        %375 = vmatpush1.msra.mxu0 0.0
        %376 = vmatprep.subr.mxu0 0.0
        %377 = vmatpush1.msra.mxu0 0.0
        %378 = vmatprep.subr.mxu0 0.0
        %379 = vmatpush1.msra.mxu0 0.0
        %380 = vmatprep.subr.mxu0 0.0
        %381 = vmatpush1.msra.mxu0 0.0
        %382 = vmatprep.subr.mxu0 0.0
        %383 = vmatpush1.msra.mxu0 0.0
        %384 = vmatprep.subr.mxu0 0.0
        %385 = vmatpush1.msra.mxu0 0.0
        %386 = vmatprep.subr.mxu0 0.0
        %387 = vmatpush1.msra.mxu0 0.0
        %388 = vmatprep.mubr.f32.mxu0 0.0
        %v389 = vand.u32 %v223, 4294901760
        %390 = vmatmul.mubr.f32.gmra.mrb[0].mxu0 %v389
        %v391 = vpop.f32.mrb[0].mxu0
        %v392 = vadd.f32 %v301, %v391
        %v393 = vpop.f32.mrb[0].mxu0
        %394 = vdwg.mxu0
        %395 = vmatprep.subr.mxu0 0.0
        %v396 = vand.u32 %v217, 4294901760
        %v397 = vsub.f32 %v217, %v396
        %398 = vmatpush1.msra.mxu0 %v397
        %399 = vmatprep.subr.mxu0 0.0
        %v400 = vand.u32 %v218, 4294901760
        %v401 = vsub.f32 %v218, %v400
        %402 = vmatpush1.msra.mxu0 %v401
        %403 = vmatprep.subr.mxu0 0.0
        %v404 = vand.u32 %v219, 4294901760
        %v405 = vsub.f32 %v219, %v404
        %406 = vmatpush1.msra.mxu0 %v405
        %407 = vmatprep.subr.mxu0 0.0
        %v408 = vand.u32 %v220, 4294901760
        %v409 = vsub.f32 %v220, %v408
        %410 = vmatpush1.msra.mxu0 %v409
        %411 = vmatprep.subr.mxu0 0.0
        %412 = vmatpush1.msra.mxu0 0.0
        %413 = vmatprep.subr.mxu0 0.0
        %414 = vmatpush1.msra.mxu0 0.0
        %415 = vmatprep.subr.mxu0 0.0
        %416 = vmatpush1.msra.mxu0 0.0
        %417 = vmatprep.subr.mxu0 0.0
        %418 = vmatpush1.msra.mxu0 0.0
        %419 = vmatprep.subr.mxu0 0.0
        %420 = vmatpush1.msra.mxu0 0.0
        %421 = vmatprep.subr.mxu0 0.0
        %422 = vmatpush1.msra.mxu0 0.0
        %423 = vmatprep.subr.mxu0 0.0
        %424 = vmatpush1.msra.mxu0 0.0
        %425 = vmatprep.subr.mxu0 0.0
        %426 = vmatpush1.msra.mxu0 0.0
        %427 = vmatprep.subr.mxu0 0.0
        %428 = vmatpush1.msra.mxu0 0.0
        %429 = vmatprep.subr.mxu0 0.0
        %430 = vmatpush1.msra.mxu0 0.0
        %431 = vmatprep.subr.mxu0 0.0
        %432 = vmatpush1.msra.mxu0 0.0
        %433 = vmatprep.subr.mxu0 0.0
        %434 = vmatpush1.msra.mxu0 0.0
        %435 = vmatprep.subr.mxu0 0.0
        %436 = vmatpush1.msra.mxu0 0.0
        %437 = vmatprep.subr.mxu0 0.0
        %438 = vmatpush1.msra.mxu0 0.0
        %439 = vmatprep.subr.mxu0 0.0
        %440 = vmatpush1.msra.mxu0 0.0
        %441 = vmatprep.subr.mxu0 0.0
        %442 = vmatpush1.msra.mxu0 0.0
        %443 = vmatprep.subr.mxu0 0.0
        %444 = vmatpush1.msra.mxu0 0.0
        %445 = vmatprep.subr.mxu0 0.0
        %446 = vmatpush1.msra.mxu0 0.0
        %447 = vmatprep.subr.mxu0 0.0
        %448 = vmatpush1.msra.mxu0 0.0
        %449 = vmatprep.subr.mxu0 0.0
        %450 = vmatpush1.msra.mxu0 0.0
        %451 = vmatprep.subr.mxu0 0.0
        %452 = vmatpush1.msra.mxu0 0.0
        %453 = vmatprep.subr.mxu0 0.0
        %454 = vmatpush1.msra.mxu0 0.0
        %455 = vmatprep.subr.mxu0 0.0
        %456 = vmatpush1.msra.mxu0 0.0
        %457 = vmatprep.subr.mxu0 0.0
        %458 = vmatpush1.msra.mxu0 0.0
        %459 = vmatprep.subr.mxu0 0.0
        %460 = vmatpush1.msra.mxu0 0.0
        %461 = vmatprep.subr.mxu0 0.0
        %462 = vmatpush1.msra.mxu0 0.0
        %463 = vmatprep.subr.mxu0 0.0
        %464 = vmatpush1.msra.mxu0 0.0
        %465 = vmatprep.subr.mxu0 0.0
        %466 = vmatpush1.msra.mxu0 0.0
        %467 = vmatprep.mubr.f32.mxu0 0.0
        %v468 = vand.u32 %v223, 4294901760
        %v469 = vsub.f32 %v223, %v468
        %470 = vmatmul.mubr.f32.gmra.mrb[0].mxu0 %v469
        %v471 = vpop.f32.mrb[0].mxu0
        %v472 = vadd.f32 %v392, %v471
        %v473 = vpop.f32.mrb[0].mxu0
        %474 = vdwg.mxu0
        %475 = vmatprep.subr.mxu0 0.0
        %v476 = vand.u32 %v217, 4294901760
        %477 = vmatpush1.msra.mxu0 %v476
        %478 = vmatprep.subr.mxu0 0.0
        %v479 = vand.u32 %v218, 4294901760
        %480 = vmatpush1.msra.mxu0 %v479
        %481 = vmatprep.subr.mxu0 0.0
        %v482 = vand.u32 %v219, 4294901760
        %483 = vmatpush1.msra.mxu0 %v482
        %484 = vmatprep.subr.mxu0 0.0
        %v485 = vand.u32 %v220, 4294901760
        %486 = vmatpush1.msra.mxu0 %v485
        %487 = vmatprep.subr.mxu0 0.0
        %488 = vmatpush1.msra.mxu0 0.0
        %489 = vmatprep.subr.mxu0 0.0
        %490 = vmatpush1.msra.mxu0 0.0
        %491 = vmatprep.subr.mxu0 0.0
        %492 = vmatpush1.msra.mxu0 0.0
        %493 = vmatprep.subr.mxu0 0.0
        %494 = vmatpush1.msra.mxu0 0.0
        %495 = vmatprep.subr.mxu0 0.0
        %496 = vmatpush1.msra.mxu0 0.0
        %497 = vmatprep.subr.mxu0 0.0
        %498 = vmatpush1.msra.mxu0 0.0
        %499 = vmatprep.subr.mxu0 0.0
        %500 = vmatpush1.msra.mxu0 0.0
        %501 = vmatprep.subr.mxu0 0.0
        %502 = vmatpush1.msra.mxu0 0.0
        %503 = vmatprep.subr.mxu0 0.0
        %504 = vmatpush1.msra.mxu0 0.0
        %505 = vmatprep.subr.mxu0 0.0
        %506 = vmatpush1.msra.mxu0 0.0
        %507 = vmatprep.subr.mxu0 0.0
        %508 = vmatpush1.msra.mxu0 0.0
        %509 = vmatprep.subr.mxu0 0.0
        %510 = vmatpush1.msra.mxu0 0.0
        %511 = vmatprep.subr.mxu0 0.0
        %512 = vmatpush1.msra.mxu0 0.0
        %513 = vmatprep.subr.mxu0 0.0
        %514 = vmatpush1.msra.mxu0 0.0
        %515 = vmatprep.subr.mxu0 0.0
        %516 = vmatpush1.msra.mxu0 0.0
        %517 = vmatprep.subr.mxu0 0.0
        %518 = vmatpush1.msra.mxu0 0.0
        %519 = vmatprep.subr.mxu0 0.0
        %520 = vmatpush1.msra.mxu0 0.0
        %521 = vmatprep.subr.mxu0 0.0
        %522 = vmatpush1.msra.mxu0 0.0
        %523 = vmatprep.subr.mxu0 0.0
        %524 = vmatpush1.msra.mxu0 0.0
        %525 = vmatprep.subr.mxu0 0.0
        %526 = vmatpush1.msra.mxu0 0.0
        %527 = vmatprep.subr.mxu0 0.0
        %528 = vmatpush1.msra.mxu0 0.0
        %529 = vmatprep.subr.mxu0 0.0
        %530 = vmatpush1.msra.mxu0 0.0
        %531 = vmatprep.subr.mxu0 0.0
        %532 = vmatpush1.msra.mxu0 0.0
        %533 = vmatprep.subr.mxu0 0.0
        %534 = vmatpush1.msra.mxu0 0.0
        %535 = vmatprep.subr.mxu0 0.0
        %536 = vmatpush1.msra.mxu0 0.0
        %537 = vmatprep.subr.mxu0 0.0
        %538 = vmatpush1.msra.mxu0 0.0
        %539 = vmatprep.subr.mxu0 0.0
        %540 = vmatpush1.msra.mxu0 0.0
        %541 = vmatprep.subr.mxu0 0.0
        %542 = vmatpush1.msra.mxu0 0.0
        %543 = vmatprep.mubr.f32.mxu0 0.0
        %v544 = vand.u32 %v223, 4294901760
        %v545 = vsub.f32 %v223, %v544
        %v546 = vand.u32 %v545, 4294901760
        %547 = vmatmul.mubr.f32.gmra.mrb[0].mxu0 %v546
        %v548 = vpop.f32.mrb[0].mxu0
        %v549 = vadd.f32 %v472, %v548
        %v550 = vpop.f32.mrb[0].mxu0
        %551 = vdwg.mxu0
        %552 = vmatprep.subr.mxu0 0.0
        %v553 = vand.u32 %v217, 4294901760
        %v554 = vsub.f32 %v217, %v553
        %v555 = vand.u32 %v554, 4294901760
        %556 = vmatpush1.msra.mxu0 %v555
        %557 = vmatprep.subr.mxu0 0.0
        %v558 = vand.u32 %v218, 4294901760
        %v559 = vsub.f32 %v218, %v558
        %v560 = vand.u32 %v559, 4294901760
        %561 = vmatpush1.msra.mxu0 %v560
        %562 = vmatprep.subr.mxu0 0.0
        %v563 = vand.u32 %v219, 4294901760
        %v564 = vsub.f32 %v219, %v563
        %v565 = vand.u32 %v564, 4294901760
        %566 = vmatpush1.msra.mxu0 %v565
        %567 = vmatprep.subr.mxu0 0.0
        %v568 = vand.u32 %v220, 4294901760
        %v569 = vsub.f32 %v220, %v568
        %v570 = vand.u32 %v569, 4294901760
        %571 = vmatpush1.msra.mxu0 %v570
        %572 = vmatprep.subr.mxu0 0.0
        %573 = vmatpush1.msra.mxu0 0.0
        %574 = vmatprep.subr.mxu0 0.0
        %575 = vmatpush1.msra.mxu0 0.0
        %576 = vmatprep.subr.mxu0 0.0
        %577 = vmatpush1.msra.mxu0 0.0
        %578 = vmatprep.subr.mxu0 0.0
        %579 = vmatpush1.msra.mxu0 0.0
        %580 = vmatprep.subr.mxu0 0.0
        %581 = vmatpush1.msra.mxu0 0.0
        %582 = vmatprep.subr.mxu0 0.0
        %583 = vmatpush1.msra.mxu0 0.0
        %584 = vmatprep.subr.mxu0 0.0
        %585 = vmatpush1.msra.mxu0 0.0
        %586 = vmatprep.subr.mxu0 0.0
        %587 = vmatpush1.msra.mxu0 0.0
        %588 = vmatprep.subr.mxu0 0.0
        %589 = vmatpush1.msra.mxu0 0.0
        %590 = vmatprep.subr.mxu0 0.0
        %591 = vmatpush1.msra.mxu0 0.0
        %592 = vmatprep.subr.mxu0 0.0
        %593 = vmatpush1.msra.mxu0 0.0
        %594 = vmatprep.subr.mxu0 0.0
        %595 = vmatpush1.msra.mxu0 0.0
        %596 = vmatprep.subr.mxu0 0.0
        %597 = vmatpush1.msra.mxu0 0.0
        %598 = vmatprep.subr.mxu0 0.0
        %599 = vmatpush1.msra.mxu0 0.0
        %600 = vmatprep.subr.mxu0 0.0
        %601 = vmatpush1.msra.mxu0 0.0
        %602 = vmatprep.subr.mxu0 0.0
        %603 = vmatpush1.msra.mxu0 0.0
        %604 = vmatprep.subr.mxu0 0.0
        %605 = vmatpush1.msra.mxu0 0.0
        %606 = vmatprep.subr.mxu0 0.0
        %607 = vmatpush1.msra.mxu0 0.0
        %608 = vmatprep.subr.mxu0 0.0
        %609 = vmatpush1.msra.mxu0 0.0
        %610 = vmatprep.subr.mxu0 0.0
        %611 = vmatpush1.msra.mxu0 0.0
        %612 = vmatprep.subr.mxu0 0.0
        %613 = vmatpush1.msra.mxu0 0.0
        %614 = vmatprep.subr.mxu0 0.0
        %615 = vmatpush1.msra.mxu0 0.0
        %616 = vmatprep.subr.mxu0 0.0
        %617 = vmatpush1.msra.mxu0 0.0
        %618 = vmatprep.subr.mxu0 0.0
        %619 = vmatpush1.msra.mxu0 0.0
        %620 = vmatprep.subr.mxu0 0.0
        %621 = vmatpush1.msra.mxu0 0.0
        %622 = vmatprep.subr.mxu0 0.0
        %623 = vmatpush1.msra.mxu0 0.0
        %624 = vmatprep.subr.mxu0 0.0
        %625 = vmatpush1.msra.mxu0 0.0
        %626 = vmatprep.subr.mxu0 0.0
        %627 = vmatpush1.msra.mxu0 0.0
        %628 = vmatprep.mubr.f32.mxu0 0.0
        %v629 = vand.u32 %v223, 4294901760
        %630 = vmatmul.mubr.f32.gmra.mrb[0].mxu0 %v629
        %v631 = vpop.f32.mrb[0].mxu0
        %v632 = vadd.f32 %v549, %v631
        %v633 = vpop.f32.mrb[0].mxu0
        %634 = vdwg.mxu0
        %635 = vmatprep.subr.mxu0 0.0
        %v636 = vand.u32 %v217, 4294901760
        %637 = vmatpush1.msra.mxu0 %v636
        %638 = vmatprep.subr.mxu0 0.0
        %v639 = vand.u32 %v218, 4294901760
        %640 = vmatpush1.msra.mxu0 %v639
        %641 = vmatprep.subr.mxu0 0.0
        %v642 = vand.u32 %v219, 4294901760
        %643 = vmatpush1.msra.mxu0 %v642
        %644 = vmatprep.subr.mxu0 0.0
        %v645 = vand.u32 %v220, 4294901760
        %646 = vmatpush1.msra.mxu0 %v645
        %647 = vmatprep.subr.mxu0 0.0
        %648 = vmatpush1.msra.mxu0 0.0
        %649 = vmatprep.subr.mxu0 0.0
        %650 = vmatpush1.msra.mxu0 0.0
        %651 = vmatprep.subr.mxu0 0.0
        %652 = vmatpush1.msra.mxu0 0.0
        %653 = vmatprep.subr.mxu0 0.0
        %654 = vmatpush1.msra.mxu0 0.0
        %655 = vmatprep.subr.mxu0 0.0
        %656 = vmatpush1.msra.mxu0 0.0
        %657 = vmatprep.subr.mxu0 0.0
        %658 = vmatpush1.msra.mxu0 0.0
        %659 = vmatprep.subr.mxu0 0.0
        %660 = vmatpush1.msra.mxu0 0.0
        %661 = vmatprep.subr.mxu0 0.0
        %662 = vmatpush1.msra.mxu0 0.0
        %663 = vmatprep.subr.mxu0 0.0
        %664 = vmatpush1.msra.mxu0 0.0
        %665 = vmatprep.subr.mxu0 0.0
        %666 = vmatpush1.msra.mxu0 0.0
        %667 = vmatprep.subr.mxu0 0.0
        %668 = vmatpush1.msra.mxu0 0.0
        %669 = vmatprep.subr.mxu0 0.0
        %670 = vmatpush1.msra.mxu0 0.0
        %671 = vmatprep.subr.mxu0 0.0
        %672 = vmatpush1.msra.mxu0 0.0
        %673 = vmatprep.subr.mxu0 0.0
        %674 = vmatpush1.msra.mxu0 0.0
        %675 = vmatprep.subr.mxu0 0.0
        %676 = vmatpush1.msra.mxu0 0.0
        %677 = vmatprep.subr.mxu0 0.0
        %678 = vmatpush1.msra.mxu0 0.0
        %679 = vmatprep.subr.mxu0 0.0
        %680 = vmatpush1.msra.mxu0 0.0
        %681 = vmatprep.subr.mxu0 0.0
        %682 = vmatpush1.msra.mxu0 0.0
        %683 = vmatprep.subr.mxu0 0.0
        %684 = vmatpush1.msra.mxu0 0.0
        %685 = vmatprep.subr.mxu0 0.0
        %686 = vmatpush1.msra.mxu0 0.0
        %687 = vmatprep.subr.mxu0 0.0
        %688 = vmatpush1.msra.mxu0 0.0
        %689 = vmatprep.subr.mxu0 0.0
        %690 = vmatpush1.msra.mxu0 0.0
        %691 = vmatprep.subr.mxu0 0.0
        %692 = vmatpush1.msra.mxu0 0.0
        %693 = vmatprep.subr.mxu0 0.0
        %694 = vmatpush1.msra.mxu0 0.0
        %695 = vmatprep.subr.mxu0 0.0
        %696 = vmatpush1.msra.mxu0 0.0
        %697 = vmatprep.subr.mxu0 0.0
        %698 = vmatpush1.msra.mxu0 0.0
        %699 = vmatprep.subr.mxu0 0.0
        %700 = vmatpush1.msra.mxu0 0.0
        %701 = vmatprep.subr.mxu0 0.0
        %702 = vmatpush1.msra.mxu0 0.0
        %703 = vmatprep.mubr.f32.mxu0 0.0
        %v704 = vand.u32 %v223, 4294901760
        %705 = vmatmul.mubr.f32.gmra.mrb[0].mxu0 %v704
        %v706 = vpop.f32.mrb[0].mxu0
        %v707 = vadd.f32 %v632, %v706
        %v708 = vpop.f32.mrb[0].mxu0
        %709 = vdwg.mxu0
        %710 = vst [vmem:[%s174] sm:$0xff] %v707
        %s711 = sand.u32 %s94, 1
        %s712 = scalar_lea.sflag [#allocation4], %s711
        %s713 = sand.u32 %s94, 1
        %s714 = smul.addr %s713, 8
        %s715 = scalar_lea.vmem [#allocation5], %s714
        // Predicated region
        $region37: #{tpu_custom_call.1} parent=31 // pred_check
          %p716 = pneg %p104
        $region38: #{tpu_custom_call.1} parent=31 // pred_check_branch
          %718 = sbr.rel (%p716) target = $region40
        $region39: #{tpu_custom_call.1} parent=31 // pred_region
          %s720 = ssub.s32 128, 128
          %721 = vsyncadd %s712, %s720
          %s722 = smul.addr %s18, 128
          %s723 = scalar_lea.hbm %s3, %s722
          %s725 = sshll.u32 %s715, 4
          %s726 = int_to_ptr.vmem [resolvable:$true] %s725
          %728 = dma.vmem_to_hbm [thread:$0]  %s726, 128, %s723, %s712
        $region40: #{tpu_custom_call.1} parent=31 // pred_fallthru
          _
      $region32: #{tpu_custom_call.1} parent=5 // pred_fallthru
        _
      %p729 = scmp.le.s32.totalorder 2, %s13
      // Predicated region
      $region41: #{tpu_custom_call.1} parent=5 // pred_check
        %p730 = pneg %p729
      $region42: #{tpu_custom_call.1} parent=5 // pred_check_branch
        %732 = sbr.rel (%p730) target = $region44
      $region43: #{tpu_custom_call.1} parent=5 // pred_region
        %s733 = ssub.s32 %s13, 2
        // Predicated region
        $region45: #{tpu_custom_call.1} parent=43 // pred_check
          %p734 = pneg %p110
        $region46: #{tpu_custom_call.1} parent=43 // pred_check_branch
          %736 = sbr.rel (%p734) target = $region48
        $region47: #{tpu_custom_call.1} parent=43 // pred_region
          %s737 = sand.u32 %s95, 1
          %s738 = scalar_lea.sflag [#allocation4], %s737
          %s739 = sand.u32 %s95, 1
          %s740 = smul.addr %s739, 8
          %s741 = scalar_lea.vmem [#allocation5], %s740
          %742 = dma.done %s738, 128
        $region48: #{tpu_custom_call.1} parent=43 // pred_fallthru
          _
      $region44: #{tpu_custom_call.1} parent=5 // pred_fallthru
        _
    $region6: #{tpu_custom_call.1} parent=1 // loop_footer
      %s17 = sadd.s32 1, %s13
    $region7: #{tpu_custom_call.1} parent=1 // loop_footer_branch
      %12 = sbr.rel target = $region3
    $region8: #{tpu_custom_call.1} parent=1 // loop_exit
      _
    %743 = vsyncpa [#allocation3], 1
    %s744 = scalar_lea.sflag [#allocation3], 1
    %745 = vsyncpa %s744, 1
    %746 = vsyncpa [#allocation4], 1
    %s747 = scalar_lea.sflag [#allocation4], 1
    %748 = vsyncpa %s747, 1

</llo_original>
